<compile_context>
chip_gen: v7x
topology: tpu7x:2x2x1
jax: 0.10.0
libtpu: 0.0.40
codegen_flags: <defaults>
</compile_context>

<pallas_src>
import functools

import jax
import jax.numpy as jnp
from jax import lax
from jax.experimental import pallas as pl
from jax.experimental.pallas import tpu as pltpu


_VMEM_LIMIT = 40 * 1024 * 1024      # explicit: > v5e's 16 MiB scoped default, < v7x's 64 MiB physical
_NSPLIT = 2                         # pass-1 parallel split (2 TCs on v7x; harmless on v5e/v6e)
_TARGET_TILE_ELEMS = 1 << 20        # ~4 MiB f32 tiles: amortize per-step overhead, fit all generations
_SINGLE_PASS_MAX_ELEMS = 1 << 20    # fused path: ~4 MiB in + ~4 MiB out (+ temps) resident in VMEM


def _round_up(a: int, b: int) -> int:
    return (a + b - 1) // b * b


def _round_down(a: int, b: int) -> int:
    return a // b * b


def _pick_lane_width(n: int, max_lane: int):
    """Largest multiple of 128 (<= max_lane) dividing n; None if n % 128 != 0."""
    L = max(128, _round_down(max_lane, 128))
    while L >= 128:
        if n % L == 0:
            return L
        L -= 128
    return None


# --------------------------------------------------------------------------- kernels
def _fused_kernel(x_ref, o_ref, *, inv_n):
    """Single pass: load whole slab, reduce, subtract mean, store."""
    x = x_ref[...].astype(jnp.float32)
    mean = jnp.sum(x) * inv_n                      # padded zeros (if any) don't affect the sum
    o_ref[...] = (x - mean).astype(o_ref.dtype)


def _partial_sum_kernel(x_ref, part_ref, acc_ref, *, tr, L, rows):
    """Per-core tiled partial sum with masked ragged tail; finalize on last k step."""
    c = pl.program_id(0)
    k = pl.program_id(1)
    nsplit = pl.num_programs(0)
    nk = pl.num_programs(1)

    @pl.when(k == 0)
    def _init():
        acc_ref[...] = jnp.zeros_like(acc_ref)

    t = k * nsplit + c                  # logical tile index (index_map clamps the DMA)
    row0 = t * tr
    x = x_ref[...].astype(jnp.float32)

    @pl.when(row0 + tr <= rows)         # fully in-bounds tile: plain VPU strip adds
    def _full():
        acc_ref[...] += jnp.sum(x.reshape(tr // 8, 8, L), axis=0)

    @pl.when(jnp.logical_and(row0 < rows, row0 + tr > rows))   # ragged tail tile
    def _tail():
        ridx = lax.broadcasted_iota(jnp.int32, (tr, L), 0) + row0
        xm = jnp.where(ridx < rows, x, 0.0)
        acc_ref[...] += jnp.sum(xm.reshape(tr // 8, 8, L), axis=0)

    # row0 >= rows (clamped duplicate tile for odd tile counts): nothing accumulated.

    @pl.when(k == nk - 1)               # one cross-lane (XLU) reduce per core
    def _fin():
        part_ref[...] = jnp.full((8, 128), jnp.sum(acc_ref[...]), dtype=jnp.float32)


def _center_kernel(part_ref, x_ref, o_ref, *, inv_n, nsplit):
    """o = x - mean, with mean fused in from the SMEM-resident per-core partials."""
    total = part_ref[0, 0]
    for c in range(1, nsplit):
        total = total + part_ref[8 * c, 0]
    mean = total * inv_n
    x = x_ref[...].astype(jnp.float32)
    o_ref[...] = (x - mean).astype(o_ref.dtype)


# --------------------------------------------------------------------------- wrapper
def centered_layer(X, *, lane_width: int = 2048, row_tile: int | None = None,
                   single_pass_max_elems: int = _SINGLE_PASS_MAX_ELEMS):
    """Pallas equivalent of CenteredLayer.forward: X - X.mean() (mean over all elements)."""
    orig_shape = X.shape
    dtype = X.dtype
    n = int(X.size)
    if n == 0:
        return X
    flat = X.reshape(-1)

    L = _pick_lane_width(n, lane_width)
    padded = False
    if L is None:
        # Fallback for n % 128 != 0 (typically tiny inputs like the (2,) example).
        # TODO(synk): large non-128-divisible inputs still pay a pad + slice copy here;
        # a 1D masked-tail path would remove it.
        L = 128
        n_eff = _round_up(n, L)
        flat = jnp.pad(flat, (0, n_eff - n))       # zero padding: no effect on the sum
        padded = True
    else:
        n_eff = n

    rows = n_eff // L
    x2d = flat.reshape(rows, L)                    # free relayout-less reshape
    inv_n = 1.0 / float(n)                         # divide by the TRUE element count

    if rows < 8 or rows * L <= single_pass_max_elems:
        # ---- single-pass fused path: read X once, write the output once.
        out2d = pl.pallas_call(
            functools.partial(_fused_kernel, inv_n=inv_n),
            out_shape=jax.ShapeDtypeStruct((rows, L), dtype),
            grid_spec=pltpu.PrefetchScalarGridSpec(
                num_scalar_prefetch=0,
                grid=(1,),
                in_specs=[pl.BlockSpec((rows, L), lambda i: (0, 0))],
                out_specs=pl.BlockSpec((rows, L), lambda i: (0, 0)),
            ),
            compiler_params=pltpu.CompilerParams(
                dimension_semantics=("arbitrary",),
                vmem_limit_bytes=_VMEM_LIMIT,
            ),
        )(x2d)
    else:
        # ---- two-pass path: tiled reduction, then tiled subtract.
        if row_tile is None:
            row_tile = max(8, _TARGET_TILE_ELEMS // L)
        tr = max(8, min(_round_down(row_tile, 8), _round_down(rows, 8)))
        num_tiles = (rows + tr - 1) // tr
        k_steps = (num_tiles + _NSPLIT - 1) // _NSPLIT

        def x_map_p1(c, k):
            t = k * _NSPLIT + c
            return (jnp.minimum(t, num_tiles - 1), 0)   # clamp; dup tile fully masked in-kernel

        # pass 1: per-core partial sums (leading "parallel" axis -> both TCs on v7x)
        partials = pl.pallas_call(
            functools.partial(_partial_sum_kernel, tr=tr, L=L, rows=rows),
            out_shape=jax.ShapeDtypeStruct((_NSPLIT * 8, 128), jnp.float32),
            grid_spec=pltpu.PrefetchScalarGridSpec(
                num_scalar_prefetch=0,
                grid=(_NSPLIT, k_steps),
                in_specs=[pl.BlockSpec((tr, L), x_map_p1)],
                out_specs=pl.BlockSpec((8, 128), lambda c, k: (c, 0)),
                scratch_shapes=[pltpu.VMEM((8, L), jnp.float32)],
            ),
            compiler_params=pltpu.CompilerParams(
                dimension_semantics=("parallel", "arbitrary"),
                vmem_limit_bytes=_VMEM_LIMIT,
            ),
        )(x2d)

        # pass 2: elementwise subtract; mean computed in-kernel from SMEM partials.
        out2d = pl.pallas_call(
            functools.partial(_center_kernel, inv_n=inv_n, nsplit=_NSPLIT),
            out_shape=jax.ShapeDtypeStruct((rows, L), dtype),
            grid_spec=pltpu.PrefetchScalarGridSpec(
                num_scalar_prefetch=0,
                grid=(num_tiles,),
                in_specs=[
                    pl.BlockSpec(memory_space=pltpu.MemorySpace.SMEM),   # per-core partial sums
                    pl.BlockSpec((tr, L), lambda i: (i, 0)),             # x tile
                ],
                out_specs=pl.BlockSpec((tr, L), lambda i: (i, 0)),
            ),
            compiler_params=pltpu.CompilerParams(
                dimension_semantics=("parallel",),
                vmem_limit_bytes=_VMEM_LIMIT,
            ),
        )(partials, x2d)

    if padded:
        return out2d.reshape(-1)[:n].reshape(orig_shape)
    return out2d.reshape(orig_shape)


# --------------------------------------------------------------------------- tests
if __name__ == "__main__":
    key = jax.random.PRNGKey(0)
    k1, k2, k3, k4 = jax.random.split(key, 4)

    # Module's example input: X = torch.randn(size=(2,))  (unaligned -> padded fallback, fused path)
    X1 = jax.random.normal(k1, (2,), dtype=jnp.float32)
    out1 = jax.block_until_ready(centered_layer(X1))
    ref1 = X1 - jnp.mean(X1)
    assert out1.shape == X1.shape
    assert jnp.allclose(out1, ref1, atol=1e-6), (out1, ref1)

    # Lane-aligned 4-D input (n = 2048): no pad/slice, single-pass fused path.
    X2 = jax.random.normal(k2, (2, 4, 16, 16), dtype=jnp.float32)
    out2 = jax.block_until_ready(centered_layer(X2))
    ref2 = X2 - jnp.mean(X2)
    assert out2.shape == X2.shape
    assert jnp.allclose(out2, ref2, atol=1e-5)

    # Force the tiled two-pass path with small tiles: exercises the dual-core
    # ("parallel") reduction split, cross-step accumulation, the clamped duplicate
    # tile, the masked ragged tail tile of pass 1 and the write-masked tail of pass 2.
    X3 = jax.random.normal(k3, (40, 128), dtype=jnp.float32)
    out3 = jax.block_until_ready(
        centered_layer(X3, lane_width=128, row_tile=16, single_pass_max_elems=0))
    ref3 = X3 - jnp.mean(X3)
    assert out3.shape == X3.shape
    assert jnp.allclose(out3, ref3, atol=1e-5)

    # bf16 input through the fused path (f32 compute, bf16 store).
    X4 = jax.random.normal(k4, (4, 128), dtype=jnp.bfloat16)
    out4 = jax.block_until_ready(centered_layer(X4))
    ref4 = X4.astype(jnp.float32) - jnp.mean(X4.astype(jnp.float32))
    assert out4.shape == X4.shape
    assert jnp.allclose(out4.astype(jnp.float32), ref4, atol=2e-2)

    print("KERNEL_OK")
</pallas_src>

<mosaic_0001>
module attributes {stable_mosaic.version = 11 : i64} {
  func.func @_fused_kernel(%arg0: i32, %arg1: memref<1x128xf32, #tpu.memory_space<vmem>>, %arg2: memref<1x128xf32, #tpu.memory_space<vmem>>) attributes {dimension_semantics = [#tpu.dimension_semantics<arbitrary>], iteration_bounds = array<i64: 1>, scalar_prefetch = 0 : i64, scratch_operands = 0 : i64, tpu.core_type = #tpu.core_type<tc>, window_params = [{pipeline_mode = #tpu.pipeline_mode<synchronous>, transform_indices = @transform_0, window_bounds = array<i64: 1, 128>}, {pipeline_mode = #tpu.pipeline_mode<synchronous>, transform_indices = @transform_1, window_bounds = array<i64: 1, 128>}]} {
    %c0 = arith.constant 0 : index
    %c0_0 = arith.constant 0 : index
    %0 = vector.load %arg1[%c0, %c0_0] : memref<1x128xf32, #tpu.memory_space<vmem>>, vector<1x128xf32>
    %1 = vector.shape_cast %0 : vector<1x128xf32> to vector<1x1x128xf32>
    %cst = arith.constant dense<0.000000e+00> : vector<1xf32>
    %2 = vector.multi_reduction <add>, %1, %cst [1, 2] : vector<1x1x128xf32> to vector<1xf32>
    %3 = vector.shape_cast %2 : vector<1xf32> to vector<1x1x1xf32>
    %4 = vector.extract %3[0, 0, 0] : f32 from vector<1x1x1xf32>
    %cst_1 = arith.constant 5.000000e-01 : f32
    %5 = arith.mulf %4, %cst_1 : f32
    %6 = vector.broadcast %5 : f32 to vector<1x128xf32>
    %7 = arith.subf %0, %6 : vector<1x128xf32>
    %c0_2 = arith.constant 0 : index
    %c0_3 = arith.constant 0 : index
    %8 = vector.load %arg2[%c0_2, %c0_3] : memref<1x128xf32, #tpu.memory_space<vmem>>, vector<1x128xf32>
    tpu.vector_store %arg2[%c0_2, %c0_3], %7 {strides = array<i32>} : memref<1x128xf32, #tpu.memory_space<vmem>>, vector<1x128xf32>,
    return
  }
  func.func @transform_0(%arg0: i32) -> (i32, i32) {
    %c0_i32 = arith.constant 0 : i32
    %c0_i32_0 = arith.constant 0 : i32
    %c0_i32_1 = arith.constant 0 : i32
    return %c0_i32, %c0_i32_0 : i32, i32
  }
  func.func @transform_1(%arg0: i32) -> (i32, i32) {
    %c0_i32 = arith.constant 0 : i32
    %c0_i32_0 = arith.constant 0 : i32
    %c0_i32_1 = arith.constant 0 : i32
    return %c0_i32, %c0_i32_0 : i32, i32
  }
}

</mosaic_0001>

<llo_original>
// kernel: tpu_custom_call.1
$region0: #{tpu_custom_call.1}
  #allocation0 [shape = 'u32[]', space=smem, size = 0x4, offset = 0x4, fixed_abs, tag = 'smem constant byte address 0x4 - core index']
  #allocation1 [shape = 'u32[144,128]{1,0:T(1,128)}', space=vmem, size = 0x12000, scoped, tag = 'internal scratch']
  %s0 = inlined_call_operand.hbm [shape: f32[1,128], index: 0, kind: input, shape index: {}]
  %s1 = inlined_call_operand.hbm [shape: f32[1,128], index: 1, kind: output, shape index: {}]
  %s2 = sld [smem:[#allocation0]]
  $region18: #{tpu_custom_call.1} parent=0
    _
  %s4 = ssub.s32 1, %s2
  %s5 = scalar_select 0, %s4, %s2
  $region1: #{tpu_custom_call.1} parent=0
    #allocation2 [shape = 'u8[512]{0}', space=vmem, size = 0x400, scoped, tag = 'input window, operand 0, single buffered']
    #allocation3 [shape = 's32[1]{0}', space=sflag, size = 0x4, scoped, tag = 'scoped memory for tpu_custom_call.1']
    #allocation4 [shape = 's32[1]{0}', space=sflag, size = 0x4, scoped, tag = 'scoped memory for tpu_custom_call.1']
    #allocation5 [shape = 'u8[512]{0}', space=vmem, size = 0x400, scoped, tag = 'output window, operand 0, single buffered']
    %6 = vsyncpa [#allocation3], 0
    %7 = vsyncpa [#allocation4], 0
    // Predicated region
    $region2: #{tpu_custom_call.1} parent=1 // pred_check
      _
    $region3: #{tpu_custom_call.1} parent=1 // pred_check_branch
      %9 = sbr.rel (0) target = $region5
    $region4: #{tpu_custom_call.1} parent=1 // pred_region
      %s11 = ssub.s32 16, 16
      %12 = vsyncadd [#allocation3], %s11
      %s14 = sshll.u32 [#allocation2], 4
      %s15 = int_to_ptr.vmem [resolvable:$true] %s14
      %17 = dma.hbm_to_vmem [thread:$0]  %s0, 16, %s15, [#allocation3]
    $region5: #{tpu_custom_call.1} parent=1 // pred_fallthru
      _
    // Predicated region
    $region6: #{tpu_custom_call.1} parent=1 // pred_check
      _
    $region7: #{tpu_custom_call.1} parent=1 // pred_check_branch
      %19 = sbr.rel (0) target = $region9
    $region8: #{tpu_custom_call.1} parent=1 // pred_region
      %20 = dma.done [#allocation3], 16
    $region9: #{tpu_custom_call.1} parent=1 // pred_fallthru
      _
    %v21 = vld [vmem:[#allocation2] sm:$0x1]
    %vm22 = vcmask 1040384
    %v23 = vsel %vm22, %v21, 0.0
    %24 = vadd.xlane.f32.xlu0 %v23
    %v25 = vpop.xlane.xlu0 %24
    %v26 = vrot.slane %v25, 4
    %v27 = vadd.f32 %v25, %v26
    %v28 = vrot.slane %v27, 2
    %v29 = vadd.f32 %v27, %v28
    %v30 = vrot.slane %v29, 1
    %v31 = vadd.f32 %v29, %v30
    %s32 = vtos %v31
    %s33 = smul.f32 %s32, 0.5
    %v34 = vstv %s33
    %v35 = vsub.f32 %v21, %v34
    %36 = vst [vmem:[#allocation5] sm:$0x1] %v35
    // Predicated region
    $region10: #{tpu_custom_call.1} parent=1 // pred_check
      _
    $region11: #{tpu_custom_call.1} parent=1 // pred_check_branch
      %38 = sbr.rel (0) target = $region13
    $region12: #{tpu_custom_call.1} parent=1 // pred_region
      %s40 = ssub.s32 16, 16
      %41 = vsyncadd [#allocation4], %s40
      %s43 = sshll.u32 [#allocation5], 4
      %s44 = int_to_ptr.vmem [resolvable:$true] %s43
      %46 = dma.vmem_to_hbm [thread:$0]  %s44, 16, %s1, [#allocation4]
    $region13: #{tpu_custom_call.1} parent=1 // pred_fallthru
      _
    // Predicated region
    $region14: #{tpu_custom_call.1} parent=1 // pred_check
      _
    $region15: #{tpu_custom_call.1} parent=1 // pred_check_branch
      %48 = sbr.rel (0) target = $region17
    $region16: #{tpu_custom_call.1} parent=1 // pred_region
      %49 = dma.done [#allocation4], 16
    $region17: #{tpu_custom_call.1} parent=1 // pred_fallthru
      _
    %50 = vsyncpa [#allocation3], 1
    %51 = vsyncpa [#allocation4], 1

</llo_original>
